<compile_context>
chip_gen: v7x
topology: tpu7x:2x2x1
jax: 0.10.0
libtpu: 0.0.40
codegen_flags: <defaults>
</compile_context>

<pallas_src>
import math

import jax
import jax.numpy as jnp
from jax.experimental import pallas as pl
from jax.experimental.pallas import tpu as pltpu


# ---------------------------------------------------------------------------
# Layout / budget helpers
# ---------------------------------------------------------------------------
def _sublane_multiple(*dtypes):
    """Sublane packing granularity: 8 for f32, 16 for bf16, 32 for int8/fp8."""
    m = 8
    for dt in dtypes:
        m = max(m, 8 * (4 // jnp.dtype(dt).itemsize))
    return m


def _tile_budget():
    """(target_tile_bytes, vmem_limit_cap) gated by the chip's VMEM capacity."""
    try:
        vmem = int(getattr(pltpu.get_tpu_info(), "vmem_capacity_bytes", 64 << 20))
    except Exception:
        vmem = 64 << 20                     # conservative default (v7x-sized)
    if vmem >= (100 << 20):                 # v5e / v6e: 128 MiB VMEM
        return 8 << 20, 64 << 20
    return 4 << 20, 48 << 20                # v7x: 64 MiB physical VMEM


def _choose_layout(n_elems, sublane, row_bytes_factor, target_tile_bytes):
    """Lane-dense (rows, lane) view plus rows-per-tile for ~MiB-scale blocks."""
    lane = None
    for cand in (4096, 2048, 1024, 512, 256, 128):
        if n_elems % cand == 0:
            lane = cand
            break
    assert lane is not None, "caller pads the flat length to a multiple of 128"
    rows = n_elems // lane
    if rows <= sublane:
        return rows, lane, rows             # single block; block dims == array dims

    want = max(1, target_tile_bytes // (lane * row_bytes_factor))
    tile_rows = max(sublane, (min(want, rows) // sublane) * sublane)
    # Guarantee >= 2 grid blocks when the tensor allows it (both v7x TCs).
    half = ((rows // 2) // sublane) * sublane
    if half >= sublane:
        tile_rows = min(tile_rows, half)
    return rows, lane, tile_rows


# ---------------------------------------------------------------------------
# Pass 1: per-block partial max ("parallel" grid, one (8,128) slot per block).
# ---------------------------------------------------------------------------
def _make_partial_max_kernel(rows, tile_rows):
    ragged = (rows % tile_rows) != 0

    def kernel(x_ref, m_ref):
        xv = x_ref[...].astype(jnp.float32)
        if ragged:
            rid = (pl.program_id(0) * tile_rows
                   + jax.lax.broadcasted_iota(jnp.int32, xv.shape, 0))
            xv = jnp.where(rid < rows, xv, -jnp.inf)
        m_ref[...] = jnp.full(m_ref.shape, jnp.max(xv), m_ref.dtype)

    return kernel


# ---------------------------------------------------------------------------
# Pass 2: clip + noise.  TPU path uses the hardware PRNG (2 reads + 1 write).
# ---------------------------------------------------------------------------
def _pelt2_kernel_prng(seed_ref, beta_ref, x_ref, s_ref, o_ref):
    # (seed, block-id) pair seeds the PRNG -> decorrelated streams per block.
    pltpu.prng_seed(seed_ref[0], pl.program_id(0))

    beta = beta_ref[0]                                       # f32 scalar (SMEM)
    x = x_ref[...].astype(jnp.float32)
    clipped = jnp.minimum(jnp.maximum(x, 0.0), beta)         # torch.clamp(x, 0, beta)

    bits = pltpu.prng_random_bits(x_ref.shape)
    if jnp.dtype(bits.dtype) != jnp.dtype(jnp.uint32):
        bits = pltpu.bitcast(bits, jnp.uint32)
    # Mantissa trick: [1,2) - 1.5 -> U(-0.5, 0.5); U(-1,1)/2 folded away.
    noise_half = pltpu.bitcast((bits >> 9) | jnp.uint32(0x3F800000),
                               jnp.float32) - 1.5
    amp = beta * jax.nn.sigmoid(s_ref[...].astype(jnp.float32))   # EUP sigmoid
    o_ref[...] = (clipped + amp * noise_half).astype(o_ref.dtype)


def _pelt2_kernel_hostnoise(beta_ref, x_ref, s_ref, n_ref, o_ref):
    beta = beta_ref[0]
    x = x_ref[...].astype(jnp.float32)
    clipped = jnp.minimum(jnp.maximum(x, 0.0), beta)
    amp = beta * jax.nn.sigmoid(s_ref[...].astype(jnp.float32))
    o_ref[...] = (clipped + amp * n_ref[...].astype(jnp.float32)).astype(o_ref.dtype)


# ---------------------------------------------------------------------------
# Wrapper
# ---------------------------------------------------------------------------
def pelt2_forward(x, s, alpha, seed):
    """PELT2 'noisy' forward.  x, s: same shape; alpha: scalar; seed: int32."""
    orig_shape = x.shape
    n_elems = x.size
    seed_i = jnp.asarray(seed, jnp.int32).reshape(-1)[:1]            # (1,)

    xf = x.reshape(-1)
    sf = s.reshape(-1)
    pad = (-n_elems) % 128
    if pad:
        xf = jnp.pad(xf, (0, pad))
        sf = jnp.pad(sf, (0, pad))
    n_padded = n_elems + pad

    sublane = _sublane_multiple(x.dtype, s.dtype)
    row_bytes_factor = max(jnp.dtype(x.dtype).itemsize, jnp.dtype(s.dtype).itemsize)
    target_tile_bytes, vmem_cap = _tile_budget()
    rows, lane, tile_rows = _choose_layout(n_padded, sublane, row_bytes_factor,
                                           target_tile_bytes)
    grid = (pl.cdiv(rows, tile_rows),)

    x2 = xf.reshape(rows, lane)
    s2 = sf.reshape(rows, lane)

    # Streams: x + out (x.dtype), s (s.dtype), plus headroom for noise/temps.
    per_iter_bytes = tile_rows * lane * (2 * jnp.dtype(x.dtype).itemsize
                                         + jnp.dtype(s.dtype).itemsize + 4)
    vmem_limit = int(min(vmem_cap, max(32 << 20, 3 * per_iter_bytes)))

    # ---- pass 1: global max --------------------------------------------------
    x_bytes = n_elems * jnp.dtype(x.dtype).itemsize
    if pad == 0 and x_bytes >= (4 << 20):
        partial = pl.pallas_call(
            _make_partial_max_kernel(rows, tile_rows),
            out_shape=jax.ShapeDtypeStruct((grid[0] * 8, 128), jnp.float32),
            grid=grid,
            in_specs=[pl.BlockSpec((tile_rows, lane), lambda i: (i, 0))],
            out_specs=pl.BlockSpec((8, 128), lambda i: (i, 0)),
            compiler_params=pltpu.CompilerParams(
                dimension_semantics=("parallel",),
                vmem_limit_bytes=vmem_limit),
        )(x2)
        xmax = jnp.max(partial)
    else:
        # Launch-latency dominated (or padded) case: trivial XLA reduce.
        xmax = jnp.max(x).astype(jnp.float32)

    beta = (jnp.asarray(alpha, jnp.float32) * xmax).reshape(1)

    # ---- pass 2: elementwise hot path -----------------------------------------
    tile_spec = pl.BlockSpec((tile_rows, lane), lambda i: (i, 0))
    smem_spec = pl.BlockSpec(memory_space=pltpu.MemorySpace.SMEM)
    cparams = pltpu.CompilerParams(dimension_semantics=("parallel",),
                                   vmem_limit_bytes=vmem_limit)

    if jax.default_backend() == "tpu":
        out2 = pl.pallas_call(
            _pelt2_kernel_prng,
            out_shape=jax.ShapeDtypeStruct((rows, lane), x.dtype),
            grid=grid,
            in_specs=[smem_spec, smem_spec, tile_spec, tile_spec],
            out_specs=tile_spec,
            compiler_params=cparams,
        )(seed_i, beta, x2, s2)
    else:
        # TODO(synk): non-TPU backends have no prng_seed lowering; generate the
        # U(-0.5,0.5) noise in the wrapper instead (one extra HBM stream).
        key = jax.random.PRNGKey(seed_i[0])
        n2 = jax.random.uniform(key, (rows, lane), jnp.float32, -0.5, 0.5)
        out2 = pl.pallas_call(
            _pelt2_kernel_hostnoise,
            out_shape=jax.ShapeDtypeStruct((rows, lane), x.dtype),
            grid=grid,
            in_specs=[smem_spec, tile_spec, tile_spec, tile_spec],
            out_specs=tile_spec,
            compiler_params=cparams,
        )(beta, x2, s2, n2)

    out = out2.reshape(-1)
    if pad:
        out = out[:n_elems]
    return out.reshape(orig_shape)


if __name__ == "__main__":
    key = jax.random.PRNGKey(0)
    kx, kseed, kx2 = jax.random.split(key, 3)

    N, C, H, W = 2, 4, 16, 16
    x = jax.random.normal(kx, (N, C, H, W), dtype=jnp.float32)

    # Deterministic parameter init, mirroring PELT2.__init__(shape, p_init, alpha):
    #   s = ones(shape) * log(2^(1-p_init) / (1 - 2^(1-p_init))),  alpha = scalar
    p_init = 4
    alpha_val = 0.95
    s_init = math.log(2.0 ** (1 - p_init) / (1.0 - 2.0 ** (1 - p_init)))
    s = jnp.ones((N, C, H, W), jnp.float32) * s_init
    alpha = jnp.float32(alpha_val)
    seed = jax.random.randint(kseed, (1,), 0, jnp.iinfo(jnp.int32).max, dtype=jnp.int32)

    out = pelt2_forward(x, s, alpha, seed)
    jax.block_until_ready(out)

    # --- reference for the deterministic part --------------------------------
    xmax_ref = jnp.max(x)
    beta_ref = alpha * xmax_ref
    clipped_ref = jnp.clip(x, 0.0, beta_ref)
    amp_ref = beta_ref * jax.nn.sigmoid(s) / 2.0             # noise amplitude

    assert out.shape == x.shape and out.dtype == x.dtype

    # (1) Noise is correctly bounded: |out - clipped| <= beta*sigmoid(s)/2.
    resid = out - clipped_ref
    assert jnp.all(jnp.abs(resid) <= jnp.abs(amp_ref) * (1.0 + 1e-5) + 1e-6)

    # (2) Implied noise looks like U(-1,1): mean ~ 0, non-trivial spread.
    implied = resid / amp_ref
    assert jnp.abs(jnp.mean(implied)) < 0.1
    assert jnp.std(implied) > 0.3

    # (3) With sigmoid(s) ~ 0 the noise vanishes -> exact clamp(x, 0, alpha*max(x)).
    s_off = jnp.full_like(s, -40.0)
    out_det = pelt2_forward(x, s_off, alpha, seed)
    jax.block_until_ready(out_det)
    assert jnp.allclose(out_det, clipped_ref, atol=1e-6, rtol=1e-6)

    # (4) Larger deterministic case also exercises the Pallas partial-max pass.
    xb = jax.random.normal(kx2, (4, 64, 64, 64), dtype=jnp.float32)
    sb = jnp.full(xb.shape, -40.0, jnp.float32)
    out_big = pelt2_forward(xb, sb, alpha, seed)
    jax.block_until_ready(out_big)
    clip_big = jnp.clip(xb, 0.0, alpha * jnp.max(xb))
    assert jnp.allclose(out_big, clip_big, atol=1e-6, rtol=1e-6)

    print("KERNEL_OK")
</pallas_src>

<mosaic_0001>
module attributes {stable_mosaic.version = 11 : i64} {
  func.func @_pelt2_kernel_hostnoise(%arg0: i32, %arg1: memref<1xf32, #tpu.memory_space<smem>>, %arg2: memref<1x2048xf32, #tpu.memory_space<vmem>>, %arg3: memref<1x2048xf32, #tpu.memory_space<vmem>>, %arg4: memref<1x2048xf32, #tpu.memory_space<vmem>>, %arg5: memref<1x2048xf32, #tpu.memory_space<vmem>>) attributes {dimension_semantics = [#tpu.dimension_semantics<parallel>], iteration_bounds = array<i64: 1>, scalar_prefetch = 0 : i64, scratch_operands = 0 : i64, tpu.core_type = #tpu.core_type<tc>, window_params = [{transform_indices = @transform_0, window_bounds = array<i64: 1>}, {transform_indices = @transform_1, window_bounds = array<i64: 1, 2048>}, {transform_indices = @transform_2, window_bounds = array<i64: 1, 2048>}, {transform_indices = @transform_3, window_bounds = array<i64: 1, 2048>}, {transform_indices = @transform_4, window_bounds = array<i64: 1, 2048>}]} {
    %c0 = arith.constant 0 : index
    %0 = memref.load %arg1[%c0] : memref<1xf32, #tpu.memory_space<smem>>
    %c0_0 = arith.constant 0 : index
    %c0_1 = arith.constant 0 : index
    %1 = vector.load %arg2[%c0_0, %c0_1] : memref<1x2048xf32, #tpu.memory_space<vmem>>, vector<1x2048xf32>
    %cst = arith.constant 0.000000e+00 : f32
    %2 = vector.broadcast %cst : f32 to vector<1x2048xf32>
    %3 = arith.maximumf %1, %2 : vector<1x2048xf32>
    %4 = vector.broadcast %0 : f32 to vector<1x2048xf32>
    %5 = arith.minimumf %3, %4 : vector<1x2048xf32>
    %c0_2 = arith.constant 0 : index
    %c0_3 = arith.constant 0 : index
    %6 = vector.load %arg3[%c0_2, %c0_3] : memref<1x2048xf32, #tpu.memory_space<vmem>>, vector<1x2048xf32>
    %7 = arith.negf %6 : vector<1x2048xf32>
    %8 = math.exp %7 : vector<1x2048xf32>
    %cst_4 = arith.constant 1.000000e+00 : f32
    %9 = vector.broadcast %cst_4 : f32 to vector<1x2048xf32>
    %10 = arith.addf %9, %8 : vector<1x2048xf32>
    %11 = arith.divf %9, %10 : vector<1x2048xf32>
    %12 = vector.broadcast %0 : f32 to vector<1x2048xf32>
    %13 = arith.mulf %12, %11 : vector<1x2048xf32>
    %c0_5 = arith.constant 0 : index
    %c0_6 = arith.constant 0 : index
    %14 = vector.load %arg4[%c0_5, %c0_6] : memref<1x2048xf32, #tpu.memory_space<vmem>>, vector<1x2048xf32>
    %15 = arith.mulf %13, %14 : vector<1x2048xf32>
    %16 = arith.addf %5, %15 : vector<1x2048xf32>
    %c0_7 = arith.constant 0 : index
    %c0_8 = arith.constant 0 : index
    %17 = vector.load %arg5[%c0_7, %c0_8] : memref<1x2048xf32, #tpu.memory_space<vmem>>, vector<1x2048xf32>
    tpu.vector_store %arg5[%c0_7, %c0_8], %16 {strides = array<i32>} : memref<1x2048xf32, #tpu.memory_space<vmem>>, vector<1x2048xf32>,
    return
  }
  func.func @transform_0(%arg0: i32) -> i32 {
    %c0_i32 = arith.constant 0 : i32
    %c0_i32_0 = arith.constant 0 : i32
    return %c0_i32 : i32
  }
  func.func @transform_1(%arg0: i32) -> (i32, i32) {
    %c0_i32 = arith.constant 0 : i32
    %c0_i32_0 = arith.constant 0 : i32
    return %arg0, %c0_i32 : i32, i32
  }
  func.func @transform_2(%arg0: i32) -> (i32, i32) {
    %c0_i32 = arith.constant 0 : i32
    %c0_i32_0 = arith.constant 0 : i32
    return %arg0, %c0_i32 : i32, i32
  }
  func.func @transform_3(%arg0: i32) -> (i32, i32) {
    %c0_i32 = arith.constant 0 : i32
    %c0_i32_0 = arith.constant 0 : i32
    return %arg0, %c0_i32 : i32, i32
  }
  func.func @transform_4(%arg0: i32) -> (i32, i32) {
    %c0_i32 = arith.constant 0 : i32
    %c0_i32_0 = arith.constant 0 : i32
    return %arg0, %c0_i32 : i32, i32
  }
}

</mosaic_0001>

<llo_original>
// kernel: tpu_custom_call.1
$region0: #{tpu_custom_call.1}
  #allocation0 [shape = 'u32[]', space=smem, size = 0x4, offset = 0x4, fixed_abs, tag = 'smem constant byte address 0x4 - core index']
  #allocation1 [shape = 'u32[144,128]{1,0:T(1,128)}', space=vmem, size = 0x12000, scoped, tag = 'internal scratch']
  #allocation2 [shape = 'f32[1]{0:T(128)S(6)}', space=smem, size = 0x200, scoped, tag = 'scoped memory for tpu_custom_call.1']
  %s0 = inlined_call_operand.<no memory space> [shape: f32[1], index: 0, kind: input, shape index: {}]
  %s1 = inlined_call_operand.hbm [shape: f32[1,2048], index: 1, kind: input, shape index: {}]
  %s2 = inlined_call_operand.hbm [shape: f32[1,2048], index: 2, kind: input, shape index: {}]
  %s3 = inlined_call_operand.hbm [shape: f32[1,2048], index: 3, kind: input, shape index: {}]
  %s4 = inlined_call_operand.hbm [shape: f32[1,2048], index: 4, kind: output, shape index: {}]
  %s5 = sld [smem:[#allocation0]]
  $region38: #{tpu_custom_call.1} parent=0
    _
  %s7 = ssub.s32 1, %s5
  %s8 = scalar_select 0, %s7, %s5
  %9 = sst [smem:[#allocation2]] %s0
  $region1: #{tpu_custom_call.1} parent=0
    #allocation3 [shape = 'u8[8192]{0}', space=vmem, size = 0x2000, scoped, tag = 'input window, operand 1, single buffered']
    #allocation4 [shape = 's32[1]{0}', space=sflag, size = 0x4, scoped, tag = 'scoped memory for tpu_custom_call.1']
    #allocation5 [shape = 's32[1]{0}', space=sflag, size = 0x4, scoped, tag = 'scoped memory for tpu_custom_call.1']
    #allocation6 [shape = 'u8[8192]{0}', space=vmem, size = 0x2000, scoped, tag = 'input window, operand 2, single buffered']
    #allocation7 [shape = 's32[1]{0}', space=sflag, size = 0x4, scoped, tag = 'scoped memory for tpu_custom_call.1']
    #allocation8 [shape = 'u8[8192]{0}', space=vmem, size = 0x2000, scoped, tag = 'input window, operand 3, single buffered']
    #allocation9 [shape = 'u8[8192]{0}', space=vmem, size = 0x2000, scoped, tag = 'output window, operand 0, single buffered']
    %10 = vsyncpa [#allocation4], 0
    %11 = vsyncpa [#allocation7], 0
    %12 = vsyncpa [#allocation5], 0
    // Predicated region
    $region2: #{tpu_custom_call.1} parent=1 // pred_check
      _
    $region3: #{tpu_custom_call.1} parent=1 // pred_check_branch
      %14 = sbr.rel (0) target = $region5
    $region4: #{tpu_custom_call.1} parent=1 // pred_region
      _
    $region5: #{tpu_custom_call.1} parent=1 // pred_fallthru
      _
    // Predicated region
    $region6: #{tpu_custom_call.1} parent=1 // pred_check
      _
    $region7: #{tpu_custom_call.1} parent=1 // pred_check_branch
      %16 = sbr.rel (0) target = $region9
    $region8: #{tpu_custom_call.1} parent=1 // pred_region
      %s18 = ssub.s32 256, 256
      %19 = vsyncadd [#allocation4], %s18
      %s21 = sshll.u32 [#allocation3], 4
      %s22 = int_to_ptr.vmem [resolvable:$true] %s21
      %24 = dma.hbm_to_vmem [thread:$0]  %s1, 256, %s22, [#allocation4]
    $region9: #{tpu_custom_call.1} parent=1 // pred_fallthru
      _
    // Predicated region
    $region10: #{tpu_custom_call.1} parent=1 // pred_check
      _
    $region11: #{tpu_custom_call.1} parent=1 // pred_check_branch
      %26 = sbr.rel (0) target = $region13
    $region12: #{tpu_custom_call.1} parent=1 // pred_region
      %s28 = ssub.s32 256, 256
      %29 = vsyncadd [#allocation7], %s28
      %s31 = sshll.u32 [#allocation6], 4
      %s32 = int_to_ptr.vmem [resolvable:$true] %s31
      %34 = dma.hbm_to_vmem [thread:$0]  %s2, 256, %s32, [#allocation7]
    $region13: #{tpu_custom_call.1} parent=1 // pred_fallthru
      _
    // Predicated region
    $region14: #{tpu_custom_call.1} parent=1 // pred_check
      _
    $region15: #{tpu_custom_call.1} parent=1 // pred_check_branch
      %36 = sbr.rel (0) target = $region17
    $region16: #{tpu_custom_call.1} parent=1 // pred_region
      %s38 = ssub.s32 256, 256
      %39 = vsyncadd [#allocation7], %s38
      %s41 = sshll.u32 [#allocation8], 4
      %s42 = int_to_ptr.vmem [resolvable:$true] %s41
      %44 = dma.hbm_to_vmem [thread:$0]  %s3, 256, %s42, [#allocation7]
    $region17: #{tpu_custom_call.1} parent=1 // pred_fallthru
      _
    // Predicated region
    $region18: #{tpu_custom_call.1} parent=1 // pred_check
      _
    $region19: #{tpu_custom_call.1} parent=1 // pred_check_branch
      %46 = sbr.rel (0) target = $region21
    $region20: #{tpu_custom_call.1} parent=1 // pred_region
      %47 = dma.done [#allocation4], 256
    $region21: #{tpu_custom_call.1} parent=1 // pred_fallthru
      _
    // Predicated region
    $region22: #{tpu_custom_call.1} parent=1 // pred_check
      _
    $region23: #{tpu_custom_call.1} parent=1 // pred_check_branch
      %49 = sbr.rel (0) target = $region25
    $region24: #{tpu_custom_call.1} parent=1 // pred_region
      %50 = dma.done [#allocation7], 256
    $region25: #{tpu_custom_call.1} parent=1 // pred_fallthru
      _
    // Predicated region
    $region26: #{tpu_custom_call.1} parent=1 // pred_check
      _
    $region27: #{tpu_custom_call.1} parent=1 // pred_check_branch
      %52 = sbr.rel (0) target = $region29
    $region28: #{tpu_custom_call.1} parent=1 // pred_region
      %53 = dma.done [#allocation7], 256
    $region29: #{tpu_custom_call.1} parent=1 // pred_fallthru
      _
    %s54 = sld [smem:[#allocation2]]
    %v55 = vld [vmem:[#allocation3] sm:$0xff]
    %v56 = vld [vmem:[#allocation3 + $0x8] sm:$0xff]
    %v57 = vmax.f32 %v55, 0.0
    %v58 = vmax.f32 %v56, 0.0
    %v59 = vstv %s54
    %v60 = vmin.f32 %v57, %v59
    %v61 = vmin.f32 %v58, %v59
    %v62 = vld [vmem:[#allocation6] sm:$0xff]
    %v63 = vld [vmem:[#allocation6 + $0x8] sm:$0xff]
    %v64 = vxor.u32 %v62, 2147483648
    %v65 = vxor.u32 %v63, 2147483648
    %v66 = vmul.f32 %v64, 1.442695
    %v67 = vpow.pop %v66
    %v68 = vmul.f32 %v65, 1.442695
    %v69 = vpow.pop %v68
    %v70 = vadd.f32 %v67, 1.0
    %v71 = vadd.f32 %v69, 1.0
    %v72 = vrcp.pop %v70
    %v73 = vmul.f32 1.0, %v72
    %v74 = vrcp.pop %v71
    %v75 = vmul.f32 1.0, %v74
    %v76 = vmul.f32 %v59, %v73
    %v77 = vmul.f32 %v59, %v75
    %v78 = vld [vmem:[#allocation8] sm:$0xff]
    %v79 = vld [vmem:[#allocation8 + $0x8] sm:$0xff]
    %v80 = vmul.f32 %v76, %v78
    %v81 = vmul.f32 %v77, %v79
    %v82 = vadd.f32 %v60, %v80
    %v83 = vadd.f32 %v61, %v81
    %84 = vst [vmem:[#allocation9] sm:$0xff] %v82
    %85 = vst [vmem:[#allocation9 + $0x8] sm:$0xff] %v83
    // Predicated region
    $region30: #{tpu_custom_call.1} parent=1 // pred_check
      _
    $region31: #{tpu_custom_call.1} parent=1 // pred_check_branch
      %87 = sbr.rel (0) target = $region33
    $region32: #{tpu_custom_call.1} parent=1 // pred_region
      %s89 = ssub.s32 256, 256
      %90 = vsyncadd [#allocation5], %s89
      %s92 = sshll.u32 [#allocation9], 4
      %s93 = int_to_ptr.vmem [resolvable:$true] %s92
      %95 = dma.vmem_to_hbm [thread:$0]  %s93, 256, %s4, [#allocation5]
    $region33: #{tpu_custom_call.1} parent=1 // pred_fallthru
      _
    // Predicated region
    $region34: #{tpu_custom_call.1} parent=1 // pred_check
      _
    $region35: #{tpu_custom_call.1} parent=1 // pred_check_branch
      %97 = sbr.rel (0) target = $region37
    $region36: #{tpu_custom_call.1} parent=1 // pred_region
      %98 = dma.done [#allocation5], 256
    $region37: #{tpu_custom_call.1} parent=1 // pred_fallthru
      _
    %99 = vsyncpa [#allocation4], 1
    %100 = vsyncpa [#allocation7], 1
    %101 = vsyncpa [#allocation5], 1

</llo_original>
